<compile_context>
chip_gen: v6e
topology: v6e:2x2x1
jax: 0.10.0
libtpu: 0.0.40
codegen_flags: <defaults>
</compile_context>

<pallas_src>
import functools

import numpy as np
import jax
import jax.numpy as jnp
from jax.experimental import pallas as pl
from jax.experimental.pallas import tpu as pltpu


# ---------------------------------------------------------------------------
# Kernel
# ---------------------------------------------------------------------------
def rms_norm_kernel(x_ref, g_ref, o_ref, *, eps):
    """One (row_tile, D) block of flattened (batch*seq, hidden) rows."""
    # Pass 1: per-row mean of squares in f32 (VPU mul + XLU cross-lane reduce).
    ms = jnp.mean(jnp.square(x_ref[...].astype(jnp.float32)),
                  axis=-1, keepdims=True)                     # (TR, 1) f32
    inv = jax.lax.rsqrt(ms + eps)                             # EUP rsqrt
    # gamma stays f32; fold it into the per-row scale.
    scale = inv * g_ref[...]                                  # (TR, D) f32
    # Pass 2: re-read the input tile (3 vld slots/cycle, essentially free)
    # instead of keeping a full f32 copy of the block live.
    o_ref[...] = (x_ref[...] * scale).astype(o_ref.dtype)


# ---------------------------------------------------------------------------
# Tile selection (VMEM- and dtype-aware)
# ---------------------------------------------------------------------------
def _sublane_align(dtype):
    isz = jnp.dtype(dtype).itemsize
    if isz >= 4:
        return 8
    if isz == 2:
        return 16
    return 32


def _choose_row_tile(R, D, dtype):
    align = _sublane_align(dtype)
    row_bytes = D * jnp.dtype(dtype).itemsize
    total_bytes = R * row_bytes

    # Tiny problems: one block, one grid step (pipelining buys nothing).
    if total_bytes <= (2 << 20) or R <= align:
        return R

    # ~4 MiB per block; with 2x double-buffering of input AND output blocks
    # that is ~16 MiB resident -> fits default scoped VMEM on all generations
    # and leaves headroom on v7x's 64 MiB physical VMEM.
    budget = 4 << 20
    row_tile = max(align, (budget // row_bytes) // align * align)

    # Force at least ~8 grid steps so the DMA pipeline has work to overlap
    # (the ~0.35us/step overhead is negligible against multi-MiB DMAs).
    min_tiles = 8
    cap = max(align, (R // min_tiles) // align * align)
    row_tile = min(row_tile, cap, R)

    # Best effort: keep the tile count even so the "parallel" grid axis can
    # actually shard across both TensorCores on v7x.
    n_tiles = pl.cdiv(R, row_tile)
    if n_tiles > 1 and n_tiles % 2:
        cand = max(align, -(-pl.cdiv(R, n_tiles + 1) // align) * align)
        if cand <= row_tile and pl.cdiv(R, cand) % 2 == 0:
            row_tile = cand
    return row_tile


# ---------------------------------------------------------------------------
# Wrapper
# ---------------------------------------------------------------------------
def rms_norm(hidden_states, gamma, eps=1e-6, row_tile=None):
    """hidden_states: (B, S, D) ; gamma: (D,) ; returns (B, S, D)."""
    B, S, D = hidden_states.shape
    R = B * S
    x = hidden_states.reshape(R, D)
    g = gamma.reshape(1, D).astype(jnp.float32)   # keep gamma in f32 in-kernel

    if row_tile is None:
        row_tile = _choose_row_tile(R, D, hidden_states.dtype)
    row_tile = min(row_tile, R)

    # cdiv grid; the trailing partial block (if any) is handled by Pallas's
    # masked writeback -> no jnp.pad / slice round trip through HBM.
    n_tiles = pl.cdiv(R, row_tile)

    block_bytes = row_tile * D * jnp.dtype(hidden_states.dtype).itemsize
    gamma_bytes = D * 4
    # 2x in + 2x out double-buffered blocks + gamma + slack, capped so we
    # always leave headroom on v7x's 64 MiB physical VMEM.
    vmem_limit = int(min(max(4 * block_bytes + gamma_bytes + (4 << 20), 32 << 20),
                         48 << 20))

    out = pl.pallas_call(
        functools.partial(rms_norm_kernel, eps=eps),
        out_shape=jax.ShapeDtypeStruct((R, D), hidden_states.dtype),
        grid=(n_tiles,),
        in_specs=[
            pl.BlockSpec((row_tile, D), lambda i: (i, 0)),   # activations
            pl.BlockSpec((1, D), lambda i: (0, 0)),          # gamma (constant, f32)
        ],
        out_specs=pl.BlockSpec((row_tile, D), lambda i: (i, 0)),
        compiler_params=pltpu.CompilerParams(
            dimension_semantics=("parallel",),               # v7x: shard tiles over both TCs
            vmem_limit_bytes=vmem_limit),
    )(x, g)

    return out.reshape(B, S, D)


# ---------------------------------------------------------------------------
# Pure-JAX reference (mirrors the PyTorch forward)
# ---------------------------------------------------------------------------
def rms_norm_ref(x, gamma, eps=1e-6):
    ms = jnp.mean(x * x, axis=-1, keepdims=True)
    return x * jax.lax.rsqrt(ms + eps) * gamma


if __name__ == "__main__":
    B, S, D = 2, 8, 32                 # (batch, seq, hidden) per the module
    eps = 1e-6

    key = jax.random.PRNGKey(0)
    kx, kg = jax.random.split(key)
    x = jax.random.normal(kx, (B, S, D), dtype=jnp.float32)
    # nn.Parameter(torch.ones(hidden_dim)) -> init to ones; perturb slightly so
    # the gamma multiply is actually exercised.
    gamma = jnp.ones((D,), jnp.float32) + 0.01 * jax.random.normal(kg, (D,))

    out = rms_norm(x, gamma, eps)
    out = jax.block_until_ready(out)

    ref = rms_norm_ref(x, gamma, eps)
    assert out.shape == (B, S, D)
    np.testing.assert_allclose(np.asarray(out), np.asarray(ref),
                               rtol=1e-5, atol=1e-5)
    print("KERNEL_OK")
</pallas_src>

<mosaic_0001>
module attributes {stable_mosaic.version = 11 : i64} {
  func.func @rms_norm_kernel(%arg0: i32, %arg1: memref<16x32xf32, #tpu.memory_space<vmem>>, %arg2: memref<1x32xf32, #tpu.memory_space<vmem>>, %arg3: memref<16x32xf32, #tpu.memory_space<vmem>>) attributes {dimension_semantics = [#tpu.dimension_semantics<parallel>], iteration_bounds = array<i64: 1>, scalar_prefetch = 0 : i64, scratch_operands = 0 : i64, tpu.core_type = #tpu.core_type<tc>, window_params = [{transform_indices = @transform_0, window_bounds = array<i64: 16, 32>}, {pipeline_mode = #tpu.pipeline_mode<synchronous>, transform_indices = @transform_1, window_bounds = array<i64: 1, 32>}, {transform_indices = @transform_2, window_bounds = array<i64: 16, 32>}]} {
    %c0 = arith.constant 0 : index
    %c0_0 = arith.constant 0 : index
    %0 = vector.load %arg1[%c0, %c0_0] : memref<16x32xf32, #tpu.memory_space<vmem>>, vector<16x32xf32>
    %1 = arith.mulf %0, %0 : vector<16x32xf32>
    %cst = arith.constant dense<0.000000e+00> : vector<16xf32>
    %2 = vector.multi_reduction <add>, %1, %cst [1] : vector<16x32xf32> to vector<16xf32>
    %3 = vector.shape_cast %2 : vector<16xf32> to vector<16x1xf32>
    %cst_1 = arith.constant 3.200000e+01 : f32
    %4 = vector.broadcast %cst_1 : f32 to vector<16x1xf32>
    %5 = arith.divf %3, %4 : vector<16x1xf32>
    %cst_2 = arith.constant 9.99999997E-7 : f32
    %6 = vector.broadcast %cst_2 : f32 to vector<16x1xf32>
    %7 = arith.addf %5, %6 : vector<16x1xf32>
    %8 = math.rsqrt %7 : vector<16x1xf32>
    %c0_3 = arith.constant 0 : index
    %c0_4 = arith.constant 0 : index
    %9 = vector.load %arg2[%c0_3, %c0_4] : memref<1x32xf32, #tpu.memory_space<vmem>>, vector<1x32xf32>
    %10 = vector.broadcast %8 : vector<16x1xf32> to vector<16x32xf32>
    %11 = vector.broadcast %9 : vector<1x32xf32> to vector<16x32xf32>
    %12 = arith.mulf %10, %11 : vector<16x32xf32>
    %c0_5 = arith.constant 0 : index
    %c0_6 = arith.constant 0 : index
    %13 = vector.load %arg1[%c0_5, %c0_6] : memref<16x32xf32, #tpu.memory_space<vmem>>, vector<16x32xf32>
    %14 = arith.mulf %13, %12 : vector<16x32xf32>
    %c0_7 = arith.constant 0 : index
    %c0_8 = arith.constant 0 : index
    %15 = vector.load %arg3[%c0_7, %c0_8] : memref<16x32xf32, #tpu.memory_space<vmem>>, vector<16x32xf32>
    tpu.vector_store %arg3[%c0_7, %c0_8], %14 {strides = array<i32>} : memref<16x32xf32, #tpu.memory_space<vmem>>, vector<16x32xf32>,
    return
  }
  func.func @transform_0(%arg0: i32) -> (i32, i32) {
    %c0_i32 = arith.constant 0 : i32
    %c0_i32_0 = arith.constant 0 : i32
    return %arg0, %c0_i32 : i32, i32
  }
  func.func @transform_1(%arg0: i32) -> (i32, i32) {
    %c0_i32 = arith.constant 0 : i32
    %c0_i32_0 = arith.constant 0 : i32
    %c0_i32_1 = arith.constant 0 : i32
    return %c0_i32, %c0_i32_0 : i32, i32
  }
  func.func @transform_2(%arg0: i32) -> (i32, i32) {
    %c0_i32 = arith.constant 0 : i32
    %c0_i32_0 = arith.constant 0 : i32
    return %arg0, %c0_i32 : i32, i32
  }
}

</mosaic_0001>

<llo_original>
// kernel: tpu_custom_call.1
$region0: #{tpu_custom_call.1}
  #allocation0 [shape = 'u32[]', space=smem, size = 0x4, offset = 0x4, fixed_abs, tag = 'smem constant byte address 0x4 - core index']
  #allocation1 [shape = 'u32[144,128]{1,0:T(1,128)}', space=vmem, size = 0x12000, scoped, tag = 'internal scratch']
  %s0 = inlined_call_operand.hbm [shape: f32[16,32], index: 0, kind: input, shape index: {}]
  %s1 = inlined_call_operand.vmem [shape: f32[1,32], index: 1, kind: input, shape index: {}]
  %s2 = inlined_call_operand.hbm [shape: f32[16,32], index: 2, kind: output, shape index: {}]
  %s3 = sld [smem:[#allocation0]]
  $region22: #{tpu_custom_call.1} parent=0
    _
  %s5 = ssub.s32 1, %s3
  %s6 = scalar_select 0, %s5, %s3
  $region1: #{tpu_custom_call.1} parent=0
    #allocation2 [shape = 'u8[8192]{0}', space=vmem, size = 0x2000, scoped, tag = 'input window, operand 0, single buffered']
    #allocation3 [shape = 's32[1]{0}', space=sflag, size = 0x4, scoped, tag = 'scoped memory for tpu_custom_call.1']
    #allocation4 [shape = 's32[1]{0}', space=sflag, size = 0x4, scoped, tag = 'scoped memory for tpu_custom_call.1']
    #allocation5 [shape = 'u8[8192]{0}', space=vmem, size = 0x2000, scoped, tag = 'output window, operand 0, single buffered']
    %7 = vsyncpa [#allocation3], 0
    %8 = vsyncpa [#allocation4], 0
    // Predicated region
    $region2: #{tpu_custom_call.1} parent=1 // pred_check
      _
    $region3: #{tpu_custom_call.1} parent=1 // pred_check_branch
      %10 = sbr.rel (0) target = $region5
    $region4: #{tpu_custom_call.1} parent=1 // pred_region
      %s12 = ssub.s32 256, 256
      %13 = vsyncadd [#allocation3], %s12
      %s14 = sshll.u32 [#allocation2], 4
      %s15 = int_to_ptr.vmem [resolvable:$true] %s14
      %20 = dma.hbm_to_vmem [thread:$0]  %s0, 256, %s15, [#allocation3], 128, 128, 8
    $region5: #{tpu_custom_call.1} parent=1 // pred_fallthru
      _
    // Predicated region
    $region6: #{tpu_custom_call.1} parent=1 // pred_check
      _
    $region7: #{tpu_custom_call.1} parent=1 // pred_check_branch
      %22 = sbr.rel (0) target = $region9
    $region8: #{tpu_custom_call.1} parent=1 // pred_region
      _
    $region9: #{tpu_custom_call.1} parent=1 // pred_fallthru
      _
    // Predicated region
    $region10: #{tpu_custom_call.1} parent=1 // pred_check
      _
    $region11: #{tpu_custom_call.1} parent=1 // pred_check_branch
      %24 = sbr.rel (0) target = $region13
    $region12: #{tpu_custom_call.1} parent=1 // pred_region
      %25 = dma.done [#allocation3], 256
    $region13: #{tpu_custom_call.1} parent=1 // pred_fallthru
      _
    %v26 = vld [vmem:[#allocation2] sm:$0xff]
    %v27 = vld [vmem:[#allocation2 + $0x8] sm:$0xff]
    %v28 = vmul.f32 %v26, %v26
    %v29 = vmul.f32 %v27, %v27
    %vm30 = vcmask 261120
    %v31 = vsel %vm30, %v28, 0.0
    %32 = vadd.xlane.f32.xlu0 %v31
    %v33 = vpop.xlane.xlu0 %32
    %v34 = vsel %vm30, %v29, 0.0
    %35 = vadd.xlane.f32.xlu0 %v34
    %v36 = vpop.xlane.xlu0 %35
    %v37 = vrcp.pop 32.0
    %v38 = vmul.f32 %v33, %v37
    %v39 = vmul.f32 %v36, %v37
    %v40 = vadd.f32 %v38, 1e-06
    %v41 = vadd.f32 %v39, 1e-06
    %v42 = vrsqrt.pop %v40
    %v43 = vrsqrt.pop %v41
    %v44 = vld [vmem:[%s1] sm:$0x1]
    %v46 = vlaneseq
    %v47 = vshrl.u32 %v46, 7
    %v48 = vsub.s32 0, %v47
    %v49 = vrot.slane %v44, %v48
    %v51 = vmul.f32 %v42, %v49
    %v52 = vmul.f32 %v43, %v49
    %v53 = vmul.f32 %v26, %v51
    %v54 = vmul.f32 %v27, %v52
    %55 = vst.msk [vmem:[#allocation5] sm:$0xff] %vm30, %v53
    %56 = vst.msk [vmem:[#allocation5 + $0x8] sm:$0xff] %vm30, %v54
    // Predicated region
    $region14: #{tpu_custom_call.1} parent=1 // pred_check
      _
    $region15: #{tpu_custom_call.1} parent=1 // pred_check_branch
      %58 = sbr.rel (0) target = $region17
    $region16: #{tpu_custom_call.1} parent=1 // pred_region
      %s60 = ssub.s32 256, 256
      %61 = vsyncadd [#allocation4], %s60
      %s62 = sshll.u32 [#allocation5], 4
      %s63 = int_to_ptr.vmem [resolvable:$true] %s62
      %68 = dma.vmem_to_hbm [thread:$0]  %s63, 256, %s2, [#allocation4], 128, 128, 8
    $region17: #{tpu_custom_call.1} parent=1 // pred_fallthru
      _
    // Predicated region
    $region18: #{tpu_custom_call.1} parent=1 // pred_check
      _
    $region19: #{tpu_custom_call.1} parent=1 // pred_check_branch
      %70 = sbr.rel (0) target = $region21
    $region20: #{tpu_custom_call.1} parent=1 // pred_region
      %71 = dma.done [#allocation4], 256
    $region21: #{tpu_custom_call.1} parent=1 // pred_fallthru
      _
    %72 = vsyncpa [#allocation3], 1
    %73 = vsyncpa [#allocation4], 1

</llo_original>
